<compile_context>
chip_gen: v7x
topology: tpu7x:2x2x1
jax: 0.10.0
libtpu: 0.0.40
codegen_flags: <defaults>
</compile_context>

<pallas_src>
import functools

import jax
import jax.numpy as jnp
import numpy as np
from jax.experimental import pallas as pl
from jax.experimental.pallas import tpu as pltpu


def _round_up(x, m):
    return ((x + m - 1) // m) * m


def _tpu_tuning():
    """Per-generation (vmem_limit_bytes, block_m cap, default compute dtype)."""
    try:
        kind = jax.devices()[0].device_kind.lower()
    except Exception:
        kind = ""
    if "v7" in kind:
        # 64 MiB physical VMEM per TensorCore -> stay well under it.
        return 48 * 1024 * 1024, 1024, jnp.bfloat16
    if "v6" in kind:
        # 128 MiB physical VMEM, single TC: use big tiles.
        return 100 * 1024 * 1024, 2048, jnp.bfloat16
    if "v5" in kind:
        return 100 * 1024 * 1024, 2048, jnp.float32
    # Unknown generation: conservative defaults.
    return 64 * 1024 * 1024, 1024, jnp.float32


# ---------------------------------------------------------------------------
# Kernel 1: parameter-only work (runs once).
# ---------------------------------------------------------------------------
def _param_kernel(w_ref, u_ref, vt_ref, w_eff_ref, reg_ref, *, lambda_s, lambda_2):
    u = u_ref[...]                                    # (n_in_pad, n_dim_pad)  f32
    vt = vt_ref[...]                                  # (n_dim_pad, n_hid_pad) f32
    W = w_ref[...]                                    # (n_in_pad, n_hid_pad)  f32

    # dist^2 = |u_i|^2 + |v_j|^2 - 2 <u_i, v_j>, clamped at 0 (MXU-friendly).
    # Padded rows/cols carry a large sentinel coordinate so dist^2 >> 1 there
    # and w_hat clamps to 0 without any explicit mask.
    u_sq = jnp.sum(u * u, axis=1, keepdims=True)      # (n_in_pad, 1)
    v_sq = jnp.sum(vt * vt, axis=0, keepdims=True)    # (1, n_hid_pad)
    uv = jnp.dot(u, vt, preferred_element_type=jnp.float32)
    dist_sq = jnp.maximum(u_sq + v_sq - 2.0 * uv, 0.0)
    w_hat = jnp.maximum(0.0, 1.0 - dist_sq)

    # Gated weights, emitted in the streaming/compute dtype.
    w_eff_ref[...] = (W * w_hat).astype(w_eff_ref.dtype)

    # Fused regularisation reduction, exact f32 (pre-cast values).
    reg_ref[0, 0] = 0.5 * jnp.sum(lambda_s * (w_hat * w_hat) + lambda_2 * (W * W))


# ---------------------------------------------------------------------------
# Kernel 2: M-streaming gated matmul + bias + sigmoid.
# ---------------------------------------------------------------------------
def _stream_kernel(x_ref, w_eff_ref, b_ref, y_ref):
    acc = jnp.dot(x_ref[...], w_eff_ref[...], preferred_element_type=jnp.float32)
    y_ref[...] = jax.nn.sigmoid(acc + b_ref[...]).astype(y_ref.dtype)


def local_kernel_layer(x, W, u, v, b, reg_loss, *, lambda_s, lambda_2,
                       compute_dtype=None, out_dtype=jnp.float32,
                       block_m=None, vmem_limit_bytes=None):
    """Pallas implementation of LocalKernelLayer.forward((x, reg_loss))."""
    M, n_in = x.shape
    n_hid = W.shape[-1]
    n_dim = u.shape[-1]
    f32 = jnp.float32

    vmem_default, block_m_cap, compute_default = _tpu_tuning()
    if vmem_limit_bytes is None:
        vmem_limit_bytes = vmem_default
    if compute_dtype is None:
        compute_dtype = compute_default

    # Lane-dense padding (128 on lane axes, 8 on the tiny n_dim axis).
    n_in_pad = _round_up(n_in, 128)
    n_hid_pad = _round_up(n_hid, 128)
    n_dim_pad = _round_up(n_dim, 8)

    # Zero-padded parameters; padded u rows / v cols get a large sentinel
    # coordinate so w_hat is exactly 0 in the pad region (dist^2 >> 1).
    SENT = 1.0e4
    W_p = jnp.zeros((n_in_pad, n_hid_pad), f32).at[:n_in, :n_hid].set(W.astype(f32))
    u_p = jnp.zeros((n_in_pad, n_dim_pad), f32).at[:n_in, :n_dim].set(
        u.reshape(n_in, n_dim).astype(f32))
    u_p = u_p.at[n_in:, 0].set(SENT)
    vt_p = jnp.zeros((n_dim_pad, n_hid_pad), f32).at[:n_dim, :n_hid].set(
        v.reshape(n_hid, n_dim).T.astype(f32))
    vt_p = vt_p.at[0, n_hid:].set(-SENT)
    b_p = jnp.zeros((1, n_hid_pad), f32).at[0, :n_hid].set(b.reshape(n_hid).astype(f32))

    # --- call 1: parameter-only kernel (W_eff + fused reg scalar) -----------
    param_kernel = functools.partial(
        _param_kernel, lambda_s=float(lambda_s), lambda_2=float(lambda_2))
    w_eff, reg = pl.pallas_call(
        param_kernel,
        grid=(1,),
        in_specs=[
            pl.BlockSpec((n_in_pad, n_hid_pad), lambda i: (0, 0)),   # W
            pl.BlockSpec((n_in_pad, n_dim_pad), lambda i: (0, 0)),   # u
            pl.BlockSpec((n_dim_pad, n_hid_pad), lambda i: (0, 0)),  # v^T
        ],
        out_specs=(
            pl.BlockSpec((n_in_pad, n_hid_pad), lambda i: (0, 0)),   # W_eff
            pl.BlockSpec(memory_space=pltpu.MemorySpace.SMEM),       # reg scalar
        ),
        out_shape=(
            jax.ShapeDtypeStruct((n_in_pad, n_hid_pad), compute_dtype),
            jax.ShapeDtypeStruct((1, 1), jnp.float32),
        ),
        compiler_params=pltpu.CompilerParams(
            dimension_semantics=("arbitrary",),
            vmem_limit_bytes=vmem_limit_bytes,
        ),
    )(W_p, u_p, vt_p)

    # --- call 2: batch-streaming gated matmul --------------------------------
    in_itemsize = jnp.dtype(compute_dtype).itemsize
    out_itemsize = jnp.dtype(out_dtype).itemsize
    if block_m is None:
        # Resident: W_eff (2 pipeline buffers) + b; streamed per row: x + y,
        # each double-buffered.
        fixed = 2 * n_in_pad * n_hid_pad * in_itemsize + 2 * n_hid_pad * 4
        per_row = 2 * (n_in_pad * in_itemsize + n_hid_pad * out_itemsize)
        budget = int(0.85 * vmem_limit_bytes)
        tm = (budget - fixed) // per_row if budget > fixed else 256
        if tm >= 256:
            tm = (tm // 256) * 256          # MXU-aligned (also a multiple of 128)
        else:
            tm = max(8, (tm // 8) * 8)
        tm = int(min(tm, block_m_cap))
        block_m = int(min(tm, _round_up(M, 8)))
    block_m = max(8, (int(block_m) // 8) * 8)
    M_pad = _round_up(M, block_m)

    # Fold the compute-dtype cast into the padding copy (free).
    x_p = jnp.zeros((M_pad, n_in_pad), compute_dtype).at[:M, :n_in].set(
        x.astype(compute_dtype))

    grid = (M_pad // block_m,)
    y_pad = pl.pallas_call(
        _stream_kernel,
        grid=grid,
        in_specs=[
            pl.BlockSpec((block_m, n_in_pad), lambda i: (i, 0)),      # x tile
            pl.BlockSpec((n_in_pad, n_hid_pad), lambda i: (0, 0)),    # W_eff (grid-invariant)
            pl.BlockSpec((1, n_hid_pad), lambda i: (0, 0)),           # b
        ],
        out_specs=pl.BlockSpec((block_m, n_hid_pad), lambda i: (i, 0)),
        out_shape=jax.ShapeDtypeStruct((M_pad, n_hid_pad), out_dtype),
        compiler_params=pltpu.CompilerParams(
            # Batch axis is fully independent -> shard across TensorCores (v7x).
            dimension_semantics=("parallel",),
            vmem_limit_bytes=vmem_limit_bytes,
        ),
    )(x_p, w_eff, b_p)

    return y_pad[:M, :n_hid], reg[0, 0] + jnp.asarray(reg_loss, f32)


def _reference(x, W, u, v, b, reg_loss, lambda_s, lambda_2):
    """Pure-JAX reference mirroring the PyTorch forward exactly."""
    dist = jnp.linalg.norm(u - v, ord=2, axis=2)            # (n_in, n_hid)
    w_hat = jnp.maximum(0.0, 1.0 - dist ** 2)
    sparse_reg = lambda_s * (jnp.sum(w_hat ** 2) / 2)
    l2_reg = lambda_2 * (jnp.sum(W ** 2) / 2)
    y = jax.nn.sigmoid(x @ (W * w_hat) + b)
    return y, reg_loss + sparse_reg + l2_reg


if __name__ == "__main__":
    # Small, deliberately non-aligned shapes to exercise padding / sentinels.
    n_in, n_hid, n_dim = 40, 50, 5
    batch = 10
    lambda_s, lambda_2 = 0.006, 20.0

    key = jax.random.PRNGKey(0)
    k_w, k_u, k_v, k_b, k_x = jax.random.split(key, 5)

    limit = float(np.sqrt(6.0 / (n_in + n_hid)))
    W = jax.random.uniform(k_w, (n_in, n_hid), jnp.float32,
                           minval=-limit, maxval=limit)
    u = 0.001 * jax.random.normal(k_u, (n_in, 1, n_dim), jnp.float32)
    v = 0.001 * jax.random.normal(k_v, (1, n_hid, n_dim), jnp.float32)
    b = jax.random.uniform(k_b, (n_hid,), jnp.float32)

    x = jax.random.normal(k_x, (batch, n_in), jnp.float32)
    reg_loss_in = jnp.float32(0.37)

    y_ref, reg_ref = _reference(x, W, u, v, b, reg_loss_in, lambda_s, lambda_2)

    # Full-precision path: tight tolerance.
    y32, reg32 = local_kernel_layer(
        x, W, u, v, b, reg_loss_in, lambda_s=lambda_s, lambda_2=lambda_2,
        compute_dtype=jnp.float32)
    y32 = jax.block_until_ready(y32)
    reg32 = jax.block_until_ready(reg32)
    np.testing.assert_allclose(np.asarray(y32), np.asarray(y_ref),
                               rtol=1e-4, atol=1e-5)
    np.testing.assert_allclose(np.asarray(reg32), np.asarray(reg_ref),
                               rtol=1e-4, atol=1e-5)

    # bf16 streaming path (default on v6e/v7x): relaxed y tolerance, reg stays
    # exact f32 (computed before the cast).
    ybf, regbf = local_kernel_layer(
        x, W, u, v, b, reg_loss_in, lambda_s=lambda_s, lambda_2=lambda_2,
        compute_dtype=jnp.bfloat16)
    ybf = jax.block_until_ready(ybf)
    regbf = jax.block_until_ready(regbf)
    np.testing.assert_allclose(np.asarray(ybf), np.asarray(y_ref),
                               rtol=5e-2, atol=1e-2)
    np.testing.assert_allclose(np.asarray(regbf), np.asarray(reg_ref),
                               rtol=1e-4, atol=1e-5)

    print("KERNEL_OK")
</pallas_src>

<mosaic_0001>
module attributes {stable_mosaic.version = 11 : i64} {
  func.func @_param_kernel(%arg0: i32, %arg1: memref<128x128xf32, #tpu.memory_space<vmem>>, %arg2: memref<128x8xf32, #tpu.memory_space<vmem>>, %arg3: memref<8x128xf32, #tpu.memory_space<vmem>>, %arg4: memref<128x128xf32, #tpu.memory_space<vmem>>, %arg5: memref<1x1xf32, #tpu.memory_space<smem>>) attributes {dimension_semantics = [#tpu.dimension_semantics<arbitrary>], iteration_bounds = array<i64: 1>, scalar_prefetch = 0 : i64, scratch_operands = 0 : i64, tpu.core_type = #tpu.core_type<tc>, window_params = [{pipeline_mode = #tpu.pipeline_mode<synchronous>, transform_indices = @transform_0, window_bounds = array<i64: 128, 128>}, {pipeline_mode = #tpu.pipeline_mode<synchronous>, transform_indices = @transform_1, window_bounds = array<i64: 128, 8>}, {pipeline_mode = #tpu.pipeline_mode<synchronous>, transform_indices = @transform_2, window_bounds = array<i64: 8, 128>}, {pipeline_mode = #tpu.pipeline_mode<synchronous>, transform_indices = @transform_3, window_bounds = array<i64: 128, 128>}, {transform_indices = @transform_4, window_bounds = array<i64: 1, 1>}]} {
    %c0 = arith.constant 0 : index
    %c0_0 = arith.constant 0 : index
    %0 = vector.load %arg2[%c0, %c0_0] : memref<128x8xf32, #tpu.memory_space<vmem>>, vector<128x8xf32>
    %c0_1 = arith.constant 0 : index
    %c0_2 = arith.constant 0 : index
    %1 = vector.load %arg3[%c0_1, %c0_2] : memref<8x128xf32, #tpu.memory_space<vmem>>, vector<8x128xf32>
    %c0_3 = arith.constant 0 : index
    %c0_4 = arith.constant 0 : index
    %2 = vector.load %arg1[%c0_3, %c0_4] : memref<128x128xf32, #tpu.memory_space<vmem>>, vector<128x128xf32>
    %3 = arith.mulf %0, %0 : vector<128x8xf32>
    %cst = arith.constant dense<0.000000e+00> : vector<128xf32>
    %4 = vector.multi_reduction <add>, %3, %cst [1] : vector<128x8xf32> to vector<128xf32>
    %5 = vector.shape_cast %4 : vector<128xf32> to vector<128x1xf32>
    %6 = arith.mulf %1, %1 : vector<8x128xf32>
    %cst_5 = arith.constant dense<0.000000e+00> : vector<128xf32>
    %7 = vector.multi_reduction <add>, %6, %cst_5 [0] : vector<8x128xf32> to vector<128xf32>
    %8 = vector.shape_cast %7 : vector<128xf32> to vector<1x128xf32>
    %cst_6 = arith.constant dense<0.000000e+00> : vector<128x128xf32>
    %9 = tpu.matmul %0, %1, %cst_6 {dimension_numbers = #tpu.dot_dimension_numbers<[1], [0], [0], [1], [0, 0, 1, 1], [], []>} : vector<128x8xf32>, vector<8x128xf32>, vector<128x128xf32> -> vector<128x128xf32>
    %10 = vector.broadcast %5 : vector<128x1xf32> to vector<128x128xf32>
    %11 = vector.broadcast %8 : vector<1x128xf32> to vector<128x128xf32>
    %12 = arith.addf %10, %11 : vector<128x128xf32>
    %cst_7 = arith.constant 2.000000e+00 : f32
    %13 = vector.broadcast %cst_7 : f32 to vector<128x128xf32>
    %14 = arith.mulf %13, %9 : vector<128x128xf32>
    %15 = arith.subf %12, %14 : vector<128x128xf32>
    %cst_8 = arith.constant 0.000000e+00 : f32
    %16 = vector.broadcast %cst_8 : f32 to vector<128x128xf32>
    %17 = arith.maximumf %15, %16 : vector<128x128xf32>
    %cst_9 = arith.constant 1.000000e+00 : f32
    %18 = vector.broadcast %cst_9 : f32 to vector<128x128xf32>
    %19 = arith.subf %18, %17 : vector<128x128xf32>
    %cst_10 = arith.constant 0.000000e+00 : f32
    %20 = vector.broadcast %cst_10 : f32 to vector<128x128xf32>
    %21 = arith.maximumf %20, %19 : vector<128x128xf32>
    %22 = arith.mulf %2, %21 : vector<128x128xf32>
    %c0_11 = arith.constant 0 : index
    %c0_12 = arith.constant 0 : index
    %23 = vector.load %arg4[%c0_11, %c0_12] : memref<128x128xf32, #tpu.memory_space<vmem>>, vector<128x128xf32>
    tpu.vector_store %arg4[%c0_11, %c0_12], %22 {strides = array<i32>} : memref<128x128xf32, #tpu.memory_space<vmem>>, vector<128x128xf32>,
    %24 = arith.mulf %21, %21 : vector<128x128xf32>
    %cst_13 = arith.constant 6.000000e-03 : f32
    %25 = vector.broadcast %cst_13 : f32 to vector<128x128xf32>
    %26 = arith.mulf %25, %24 : vector<128x128xf32>
    %27 = arith.mulf %2, %2 : vector<128x128xf32>
    %cst_14 = arith.constant 2.000000e+01 : f32
    %28 = vector.broadcast %cst_14 : f32 to vector<128x128xf32>
    %29 = arith.mulf %28, %27 : vector<128x128xf32>
    %30 = arith.addf %26, %29 : vector<128x128xf32>
    %31 = vector.shape_cast %30 : vector<128x128xf32> to vector<1x128x128xf32>
    %cst_15 = arith.constant dense<0.000000e+00> : vector<1xf32>
    %32 = vector.multi_reduction <add>, %31, %cst_15 [1, 2] : vector<1x128x128xf32> to vector<1xf32>
    %33 = vector.shape_cast %32 : vector<1xf32> to vector<1x1x1xf32>
    %34 = vector.extract %33[0, 0, 0] : f32 from vector<1x1x1xf32>
    %cst_16 = arith.constant 5.000000e-01 : f32
    %35 = arith.mulf %cst_16, %34 : f32
    %c0_17 = arith.constant 0 : index
    %c0_18 = arith.constant 0 : index
    %36 = memref.load %arg5[%c0_17, %c0_18] : memref<1x1xf32, #tpu.memory_space<smem>>
    memref.store %35, %arg5[%c0_17, %c0_18] : memref<1x1xf32, #tpu.memory_space<smem>>
    return
  }
  func.func @transform_0(%arg0: i32) -> (i32, i32) {
    %c0_i32 = arith.constant 0 : i32
    %c0_i32_0 = arith.constant 0 : i32
    %c0_i32_1 = arith.constant 0 : i32
    return %c0_i32, %c0_i32_0 : i32, i32
  }
  func.func @transform_1(%arg0: i32) -> (i32, i32) {
    %c0_i32 = arith.constant 0 : i32
    %c0_i32_0 = arith.constant 0 : i32
    %c0_i32_1 = arith.constant 0 : i32
    return %c0_i32, %c0_i32_0 : i32, i32
  }
  func.func @transform_2(%arg0: i32) -> (i32, i32) {
    %c0_i32 = arith.constant 0 : i32
    %c0_i32_0 = arith.constant 0 : i32
    %c0_i32_1 = arith.constant 0 : i32
    return %c0_i32, %c0_i32_0 : i32, i32
  }
  func.func @transform_3(%arg0: i32) -> (i32, i32) {
    %c0_i32 = arith.constant 0 : i32
    %c0_i32_0 = arith.constant 0 : i32
    %c0_i32_1 = arith.constant 0 : i32
    return %c0_i32, %c0_i32_0 : i32, i32
  }
  func.func @transform_4(%arg0: i32) -> (i32, i32) {
    %c0_i32 = arith.constant 0 : i32
    %c0_i32_0 = arith.constant 0 : i32
    %c0_i32_1 = arith.constant 0 : i32
    return %c0_i32, %c0_i32_0 : i32, i32
  }
}

</mosaic_0001>

<llo_original>
// kernel: tpu_custom_call.1
$region0: #{tpu_custom_call.1}
  #allocation0 [shape = 'u32[]', space=smem, size = 0x4, offset = 0x4, fixed_abs, tag = 'smem constant byte address 0x4 - core index']
  #allocation1 [shape = 'u32[144,128]{1,0:T(1,128)}', space=vmem, size = 0x12000, scoped, tag = 'internal scratch']
  %s0 = inlined_call_operand.hbm [shape: f32[128,128], index: 0, kind: input, shape index: {}]
  %s1 = inlined_call_operand.hbm [shape: f32[128,8], index: 1, kind: input, shape index: {}]
  %s2 = inlined_call_operand.hbm [shape: f32[8,128], index: 2, kind: input, shape index: {}]
  %s3 = inlined_call_operand.hbm [shape: f32[128,128], index: 3, kind: output, shape index: {0}]
  %s4 = inlined_call_operand.hbm [shape: f32[1,1], index: 4, kind: output, shape index: {1}]
  %5 = xla_tuple %s3, %s4
  %s6 = sld [smem:[#allocation0]]
  $region42: #{tpu_custom_call.1} parent=0
    _
  %s8 = ssub.s32 1, %s6
  %s9 = scalar_select 0, %s8, %s6
  $region1: #{tpu_custom_call.1} parent=0
    #allocation2 [shape = 'u8[65536]{0}', space=vmem, size = 0x10000, scoped, tag = 'input window, operand 0, single buffered']
    #allocation3 [shape = 's32[1]{0}', space=sflag, size = 0x4, scoped, tag = 'scoped memory for tpu_custom_call.1']
    #allocation4 [shape = 's32[1]{0}', space=sflag, size = 0x4, scoped, tag = 'scoped memory for tpu_custom_call.1']
    #allocation5 [shape = 's32[1]{0}', space=sflag, size = 0x4, scoped, tag = 'scoped memory for tpu_custom_call.1']
    #allocation6 [shape = 'u8[65536]{0}', space=vmem, size = 0x10000, scoped, tag = 'input window, operand 1, single buffered']
    #allocation7 [shape = 's32[1]{0}', space=sflag, size = 0x4, scoped, tag = 'scoped memory for tpu_custom_call.1']
    #allocation8 [shape = 'u8[4096]{0}', space=vmem, size = 0x1000, scoped, tag = 'input window, operand 2, single buffered']
    #allocation9 [shape = 'u8[65536]{0}', space=vmem, size = 0x10000, scoped, tag = 'output window, operand 0, single buffered']
    #allocation10 [shape = 'u8[512]{0}', space=smem, size = 0x200, scoped, tag = 'output window, operand 1, single buffered']
    %10 = vsyncpa [#allocation3], 0
    %11 = vsyncpa [#allocation7], 0
    %12 = vsyncpa [#allocation4], 0
    %13 = vsyncpa [#allocation5], 0
    // Predicated region
    $region2: #{tpu_custom_call.1} parent=1 // pred_check
      _
    $region3: #{tpu_custom_call.1} parent=1 // pred_check_branch
      %15 = sbr.rel (0) target = $region5
    $region4: #{tpu_custom_call.1} parent=1 // pred_region
      %s17 = ssub.s32 2048, 2048
      %18 = vsyncadd [#allocation3], %s17
      %s19 = sshll.u32 [#allocation2], 4
      %s20 = int_to_ptr.vmem [resolvable:$true] %s19
      %25 = dma.hbm_to_vmem [thread:$0]  %s0, 2048, %s20, [#allocation3], 128, 128, 8
    $region5: #{tpu_custom_call.1} parent=1 // pred_fallthru
      _
    // Predicated region
    $region6: #{tpu_custom_call.1} parent=1 // pred_check
      _
    $region7: #{tpu_custom_call.1} parent=1 // pred_check_branch
      %27 = sbr.rel (0) target = $region9
    $region8: #{tpu_custom_call.1} parent=1 // pred_region
      %s29 = ssub.s32 2048, 2048
      %30 = vsyncadd [#allocation7], %s29
      %s31 = sshll.u32 [#allocation6], 4
      %s32 = int_to_ptr.vmem [resolvable:$true] %s31
      %37 = dma.hbm_to_vmem [thread:$0]  %s1, 2048, %s32, [#allocation7], 128, 128, 8
    $region9: #{tpu_custom_call.1} parent=1 // pred_fallthru
      _
    // Predicated region
    $region10: #{tpu_custom_call.1} parent=1 // pred_check
      _
    $region11: #{tpu_custom_call.1} parent=1 // pred_check_branch
      %39 = sbr.rel (0) target = $region13
    $region12: #{tpu_custom_call.1} parent=1 // pred_region
      %s41 = ssub.s32 128, 128
      %42 = vsyncadd [#allocation7], %s41
      %s44 = sshll.u32 [#allocation8], 4
      %s45 = int_to_ptr.vmem [resolvable:$true] %s44
      %47 = dma.hbm_to_vmem [thread:$0]  %s2, 128, %s45, [#allocation7]
    $region13: #{tpu_custom_call.1} parent=1 // pred_fallthru
      _
    // Predicated region
    $region14: #{tpu_custom_call.1} parent=1 // pred_check
      _
    $region15: #{tpu_custom_call.1} parent=1 // pred_check_branch
      %49 = sbr.rel (0) target = $region17
    $region16: #{tpu_custom_call.1} parent=1 // pred_region
      %50 = dma.done [#allocation3], 2048
    $region17: #{tpu_custom_call.1} parent=1 // pred_fallthru
      _
    // Predicated region
    $region18: #{tpu_custom_call.1} parent=1 // pred_check
      _
    $region19: #{tpu_custom_call.1} parent=1 // pred_check_branch
      %52 = sbr.rel (0) target = $region21
    $region20: #{tpu_custom_call.1} parent=1 // pred_region
      %53 = dma.done [#allocation7], 2048
    $region21: #{tpu_custom_call.1} parent=1 // pred_fallthru
      _
    // Predicated region
    $region22: #{tpu_custom_call.1} parent=1 // pred_check
      _
    $region23: #{tpu_custom_call.1} parent=1 // pred_check_branch
      %55 = sbr.rel (0) target = $region25
    $region24: #{tpu_custom_call.1} parent=1 // pred_region
      %56 = dma.done [#allocation7], 128
    $region25: #{tpu_custom_call.1} parent=1 // pred_fallthru
      _
    %v57 = vld [vmem:[#allocation6] sm:$0xff]
    %v58 = vld [vmem:[#allocation6 + $0x8] sm:$0xff]
    %v59 = vld [vmem:[#allocation6 + $0x10] sm:$0xff]
    %v60 = vld [vmem:[#allocation6 + $0x18] sm:$0xff]
    %v61 = vld [vmem:[#allocation6 + $0x20] sm:$0xff]
    %v62 = vld [vmem:[#allocation6 + $0x28] sm:$0xff]
    %v63 = vld [vmem:[#allocation6 + $0x30] sm:$0xff]
    %v64 = vld [vmem:[#allocation6 + $0x38] sm:$0xff]
    %v65 = vld [vmem:[#allocation6 + $0x40] sm:$0xff]
    %v66 = vld [vmem:[#allocation6 + $0x48] sm:$0xff]
    %v67 = vld [vmem:[#allocation6 + $0x50] sm:$0xff]
    %v68 = vld [vmem:[#allocation6 + $0x58] sm:$0xff]
    %v69 = vld [vmem:[#allocation6 + $0x60] sm:$0xff]
    %v70 = vld [vmem:[#allocation6 + $0x68] sm:$0xff]
    %v71 = vld [vmem:[#allocation6 + $0x70] sm:$0xff]
    %v72 = vld [vmem:[#allocation6 + $0x78] sm:$0xff]
    %v73 = vld [vmem:[#allocation8] sm:$0xff]
    %v74 = vld [vmem:[#allocation2] sm:$0xff]
    %v75 = vld [vmem:[#allocation2 + $0x8] sm:$0xff]
    %v76 = vld [vmem:[#allocation2 + $0x10] sm:$0xff]
    %v77 = vld [vmem:[#allocation2 + $0x18] sm:$0xff]
    %v78 = vld [vmem:[#allocation2 + $0x20] sm:$0xff]
    %v79 = vld [vmem:[#allocation2 + $0x28] sm:$0xff]
    %v80 = vld [vmem:[#allocation2 + $0x30] sm:$0xff]
    %v81 = vld [vmem:[#allocation2 + $0x38] sm:$0xff]
    %v82 = vld [vmem:[#allocation2 + $0x40] sm:$0xff]
    %v83 = vld [vmem:[#allocation2 + $0x48] sm:$0xff]
    %v84 = vld [vmem:[#allocation2 + $0x50] sm:$0xff]
    %v85 = vld [vmem:[#allocation2 + $0x58] sm:$0xff]
    %v86 = vld [vmem:[#allocation2 + $0x60] sm:$0xff]
    %v87 = vld [vmem:[#allocation2 + $0x68] sm:$0xff]
    %v88 = vld [vmem:[#allocation2 + $0x70] sm:$0xff]
    %v89 = vld [vmem:[#allocation2 + $0x78] sm:$0xff]
    %v90 = vmul.f32 %v57, %v57
    %v91 = vmul.f32 %v58, %v58
    %v92 = vmul.f32 %v59, %v59
    %v93 = vmul.f32 %v60, %v60
    %v94 = vmul.f32 %v61, %v61
    %v95 = vmul.f32 %v62, %v62
    %v96 = vmul.f32 %v63, %v63
    %v97 = vmul.f32 %v64, %v64
    %v98 = vmul.f32 %v65, %v65
    %v99 = vmul.f32 %v66, %v66
    %v100 = vmul.f32 %v67, %v67
    %v101 = vmul.f32 %v68, %v68
    %v102 = vmul.f32 %v69, %v69
    %v103 = vmul.f32 %v70, %v70
    %v104 = vmul.f32 %v71, %v71
    %v105 = vmul.f32 %v72, %v72
    %vm106 = vcmask 64512
    %v107 = vsel %vm106, %v90, 0.0
    %108 = vadd.xlane.f32.xlu0 %v107
    %v109 = vpop.xlane.xlu0 %108
    %v110 = vsel %vm106, %v91, 0.0
    %111 = vadd.xlane.f32.xlu0 %v110
    %v112 = vpop.xlane.xlu0 %111
    %v113 = vsel %vm106, %v92, 0.0
    %114 = vadd.xlane.f32.xlu0 %v113
    %v115 = vpop.xlane.xlu0 %114
    %v116 = vsel %vm106, %v93, 0.0
    %117 = vadd.xlane.f32.xlu0 %v116
    %v118 = vpop.xlane.xlu0 %117
    %v119 = vsel %vm106, %v94, 0.0
    %120 = vadd.xlane.f32.xlu0 %v119
    %v121 = vpop.xlane.xlu0 %120
    %v122 = vsel %vm106, %v95, 0.0
    %123 = vadd.xlane.f32.xlu0 %v122
    %v124 = vpop.xlane.xlu0 %123
    %v125 = vsel %vm106, %v96, 0.0
    %126 = vadd.xlane.f32.xlu0 %v125
    %v127 = vpop.xlane.xlu0 %126
    %v128 = vsel %vm106, %v97, 0.0
    %129 = vadd.xlane.f32.xlu0 %v128
    %v130 = vpop.xlane.xlu0 %129
    %v131 = vsel %vm106, %v98, 0.0
    %132 = vadd.xlane.f32.xlu0 %v131
    %v133 = vpop.xlane.xlu0 %132
    %v134 = vsel %vm106, %v99, 0.0
    %135 = vadd.xlane.f32.xlu0 %v134
    %v136 = vpop.xlane.xlu0 %135
    %v137 = vsel %vm106, %v100, 0.0
    %138 = vadd.xlane.f32.xlu0 %v137
    %v139 = vpop.xlane.xlu0 %138
    %v140 = vsel %vm106, %v101, 0.0
    %141 = vadd.xlane.f32.xlu0 %v140
    %v142 = vpop.xlane.xlu0 %141
    %v143 = vsel %vm106, %v102, 0.0
    %144 = vadd.xlane.f32.xlu0 %v143
    %v145 = vpop.xlane.xlu0 %144
    %v146 = vsel %vm106, %v103, 0.0
    %147 = vadd.xlane.f32.xlu0 %v146
    %v148 = vpop.xlane.xlu0 %147
    %v149 = vsel %vm106, %v104, 0.0
    %150 = vadd.xlane.f32.xlu0 %v149
    %v151 = vpop.xlane.xlu0 %150
    %v152 = vsel %vm106, %v105, 0.0
    %153 = vadd.xlane.f32.xlu0 %v152
    %v154 = vpop.xlane.xlu0 %153
    %v155 = vmul.f32 %v73, %v73
    %v156 = vrot.slane %v155, 4
    %v157 = vadd.f32 %v155, %v156
    %v158 = vrot.slane %v157, 2
    %v159 = vadd.f32 %v157, %v158
    %v160 = vrot.slane %v159, 1
    %v161 = vadd.f32 %v159, %v160
    %v163 = vsel %vm106, %v57, 0
    %v166 = vsel %vm106, %v58, 0
    %v169 = vsel %vm106, %v59, 0
    %v172 = vsel %vm106, %v60, 0
    %v175 = vsel %vm106, %v61, 0
    %v178 = vsel %vm106, %v62, 0
    %v181 = vsel %vm106, %v63, 0
    %v184 = vsel %vm106, %v64, 0
    %v187 = vsel %vm106, %v65, 0
    %v190 = vsel %vm106, %v66, 0
    %v193 = vsel %vm106, %v67, 0
    %v196 = vsel %vm106, %v68, 0
    %v199 = vsel %vm106, %v69, 0
    %v202 = vsel %vm106, %v70, 0
    %v205 = vsel %vm106, %v71, 0
    %v208 = vsel %vm106, %v72, 0
    %210 = vmatprep.subr.mxu0 0.0
    %211 = vmatpush1.msra.mxu0 %v73
    %212 = vmatprep.subr.mxu0 0.0
    %213 = vmatpush1.msra.mxu0 0.0
    %214 = vmatprep.subr.mxu0 0.0
    %215 = vmatpush1.msra.mxu0 0.0
    %216 = vmatprep.subr.mxu0 0.0
    %217 = vmatpush1.msra.mxu0 0.0
    %218 = vmatprep.subr.mxu0 0.0
    %219 = vmatpush1.msra.mxu0 0.0
    %220 = vmatprep.subr.mxu0 0.0
    %221 = vmatpush1.msra.mxu0 0.0
    %222 = vmatprep.subr.mxu0 0.0
    %223 = vmatpush1.msra.mxu0 0.0
    %224 = vmatprep.subr.mxu0 0.0
    %225 = vmatpush1.msra.mxu0 0.0
    %226 = vmatprep.subr.mxu0 0.0
    %227 = vmatpush1.msra.mxu0 0.0
    %228 = vmatprep.subr.mxu0 0.0
    %229 = vmatpush1.msra.mxu0 0.0
    %230 = vmatprep.subr.mxu0 0.0
    %231 = vmatpush1.msra.mxu0 0.0
    %232 = vmatprep.subr.mxu0 0.0
    %233 = vmatpush1.msra.mxu0 0.0
    %234 = vmatprep.subr.mxu0 0.0
    %235 = vmatpush1.msra.mxu0 0.0
    %236 = vmatprep.subr.mxu0 0.0
    %237 = vmatpush1.msra.mxu0 0.0
    %238 = vmatprep.subr.mxu0 0.0
    %239 = vmatpush1.msra.mxu0 0.0
    %240 = vmatprep.subr.mxu0 0.0
    %241 = vmatpush1.msra.mxu0 0.0
    %242 = vmatprep.subr.mxu0 0.0
    %243 = vmatpush1.msra.mxu0 0.0
    %244 = vmatprep.subr.mxu0 0.0
    %245 = vmatpush1.msra.mxu0 0.0
    %246 = vmatprep.subr.mxu0 0.0
    %247 = vmatpush1.msra.mxu0 0.0
    %248 = vmatprep.subr.mxu0 0.0
    %249 = vmatpush1.msra.mxu0 0.0
    %250 = vmatprep.subr.mxu0 0.0
    %251 = vmatpush1.msra.mxu0 0.0
    %252 = vmatprep.subr.mxu0 0.0
    %253 = vmatpush1.msra.mxu0 0.0
    %254 = vmatprep.subr.mxu0 0.0
    %255 = vmatpush1.msra.mxu0 0.0
    %256 = vmatprep.subr.mxu0 0.0
    %257 = vmatpush1.msra.mxu0 0.0
    %258 = vmatprep.subr.mxu0 0.0
    %259 = vmatpush1.msra.mxu0 0.0
    %260 = vmatprep.subr.mxu0 0.0
    %261 = vmatpush1.msra.mxu0 0.0
    %262 = vmatprep.subr.mxu0 0.0
    %263 = vmatpush1.msra.mxu0 0.0
    %264 = vmatprep.subr.mxu0 0.0
    %265 = vmatpush1.msra.mxu0 0.0
    %266 = vmatprep.subr.mxu0 0.0
    %267 = vmatpush1.msra.mxu0 0.0
    %268 = vmatprep.subr.mxu0 0.0
    %269 = vmatpush1.msra.mxu0 0.0
    %270 = vmatprep.subr.mxu0 0.0
    %271 = vmatpush1.msra.mxu0 0.0
    %272 = vmatprep.subr.mxu0 0.0
    %273 = vmatpush1.msra.mxu0 0.0
    %274 = vmatprep.mubr.f32.mxu0 0.0
    %275 = vmatmul.mubr.f32.gmra.mrb[0].mxu0 %v163
    %v276 = vpop.f32.mrb[0].mxu0
    %v277 = vadd.f32 0.0, %v276
    %v278 = vpop.f32.mrb[0].mxu0
    %279 = vmatprep.mubr.f32.mxu0 0.0
    %280 = vmatmul.mubr.f32.gmra.mrb[0].mxu0 %v166
    %v281 = vpop.f32.mrb[0].mxu0
    %v282 = vadd.f32 0.0, %v281
    %v283 = vpop.f32.mrb[0].mxu0
    %284 = vmatprep.mubr.f32.mxu0 0.0
    %285 = vmatmul.mubr.f32.gmra.mrb[0].mxu0 %v169
    %v286 = vpop.f32.mrb[0].mxu0
    %v287 = vadd.f32 0.0, %v286
    %v288 = vpop.f32.mrb[0].mxu0
    %289 = vmatprep.mubr.f32.mxu0 0.0
    %290 = vmatmul.mubr.f32.gmra.mrb[0].mxu0 %v172
    %v291 = vpop.f32.mrb[0].mxu0
    %v292 = vadd.f32 0.0, %v291
    %v293 = vpop.f32.mrb[0].mxu0
    %294 = vmatprep.mubr.f32.mxu0 0.0
    %295 = vmatmul.mubr.f32.gmra.mrb[0].mxu0 %v175
    %v296 = vpop.f32.mrb[0].mxu0
    %v297 = vadd.f32 0.0, %v296
    %v298 = vpop.f32.mrb[0].mxu0
    %299 = vmatprep.mubr.f32.mxu0 0.0
    %300 = vmatmul.mubr.f32.gmra.mrb[0].mxu0 %v178
    %v301 = vpop.f32.mrb[0].mxu0
    %v302 = vadd.f32 0.0, %v301
    %v303 = vpop.f32.mrb[0].mxu0
    %304 = vmatprep.mubr.f32.mxu0 0.0
    %305 = vmatmul.mubr.f32.gmra.mrb[0].mxu0 %v181
    %v306 = vpop.f32.mrb[0].mxu0
    %v307 = vadd.f32 0.0, %v306
    %v308 = vpop.f32.mrb[0].mxu0
    %309 = vmatprep.mubr.f32.mxu0 0.0
    %310 = vmatmul.mubr.f32.gmra.mrb[0].mxu0 %v184
    %v311 = vpop.f32.mrb[0].mxu0
    %v312 = vadd.f32 0.0, %v311
    %v313 = vpop.f32.mrb[0].mxu0
    %314 = vmatprep.mubr.f32.mxu0 0.0
    %315 = vmatmul.mubr.f32.gmra.mrb[0].mxu0 %v187
    %v316 = vpop.f32.mrb[0].mxu0
    %v317 = vadd.f32 0.0, %v316
    %v318 = vpop.f32.mrb[0].mxu0
    %319 = vmatprep.mubr.f32.mxu0 0.0
    %320 = vmatmul.mubr.f32.gmra.mrb[0].mxu0 %v190
    %v321 = vpop.f32.mrb[0].mxu0
    %v322 = vadd.f32 0.0, %v321
    %v323 = vpop.f32.mrb[0].mxu0
    %324 = vmatprep.mubr.f32.mxu0 0.0
    %325 = vmatmul.mubr.f32.gmra.mrb[0].mxu0 %v193
    %v326 = vpop.f32.mrb[0].mxu0
    %v327 = vadd.f32 0.0, %v326
    %v328 = vpop.f32.mrb[0].mxu0
    %329 = vmatprep.mubr.f32.mxu0 0.0
    %330 = vmatmul.mubr.f32.gmra.mrb[0].mxu0 %v196
    %v331 = vpop.f32.mrb[0].mxu0
    %v332 = vadd.f32 0.0, %v331
    %v333 = vpop.f32.mrb[0].mxu0
    %334 = vmatprep.mubr.f32.mxu0 0.0
    %335 = vmatmul.mubr.f32.gmra.mrb[0].mxu0 %v199
    %v336 = vpop.f32.mrb[0].mxu0
    %v337 = vadd.f32 0.0, %v336
    %v338 = vpop.f32.mrb[0].mxu0
    %339 = vmatprep.mubr.f32.mxu0 0.0
    %340 = vmatmul.mubr.f32.gmra.mrb[0].mxu0 %v202
    %v341 = vpop.f32.mrb[0].mxu0
    %v342 = vadd.f32 0.0, %v341
    %v343 = vpop.f32.mrb[0].mxu0
    %344 = vmatprep.mubr.f32.mxu0 0.0
    %345 = vmatmul.mubr.f32.gmra.mrb[0].mxu0 %v205
    %v346 = vpop.f32.mrb[0].mxu0
    %v347 = vadd.f32 0.0, %v346
    %v348 = vpop.f32.mrb[0].mxu0
    %349 = vmatprep.mubr.f32.mxu0 0.0
    %350 = vmatmul.mubr.f32.gmra.mrb[0].mxu0 %v208
    %v351 = vpop.f32.mrb[0].mxu0
    %v352 = vadd.f32 0.0, %v351
    %v353 = vpop.f32.mrb[0].mxu0
    %354 = vdwg.mxu0
    %v355 = vadd.f32 %v109, %v161
    %v356 = vadd.f32 %v112, %v161
    %v357 = vadd.f32 %v115, %v161
    %v358 = vadd.f32 %v118, %v161
    %v359 = vadd.f32 %v121, %v161
    %v360 = vadd.f32 %v124, %v161
    %v361 = vadd.f32 %v127, %v161
    %v362 = vadd.f32 %v130, %v161
    %v363 = vadd.f32 %v133, %v161
    %v364 = vadd.f32 %v136, %v161
    %v365 = vadd.f32 %v139, %v161
    %v366 = vadd.f32 %v142, %v161
    %v367 = vadd.f32 %v145, %v161
    %v368 = vadd.f32 %v148, %v161
    %v369 = vadd.f32 %v151, %v161
    %v370 = vadd.f32 %v154, %v161
    %v371 = vmul.f32 %v277, 2.0
    %v372 = vmul.f32 %v282, 2.0
    %v373 = vmul.f32 %v287, 2.0
    %v374 = vmul.f32 %v292, 2.0
    %v375 = vmul.f32 %v297, 2.0
    %v376 = vmul.f32 %v302, 2.0
    %v377 = vmul.f32 %v307, 2.0
    %v378 = vmul.f32 %v312, 2.0
    %v379 = vmul.f32 %v317, 2.0
    %v380 = vmul.f32 %v322, 2.0
    %v381 = vmul.f32 %v327, 2.0
    %v382 = vmul.f32 %v332, 2.0
    %v383 = vmul.f32 %v337, 2.0
    %v384 = vmul.f32 %v342, 2.0
    %v385 = vmul.f32 %v347, 2.0
    %v386 = vmul.f32 %v352, 2.0
    %v387 = vsub.f32 %v355, %v371
    %v388 = vsub.f32 %v356, %v372
    %v389 = vsub.f32 %v357, %v373
    %v390 = vsub.f32 %v358, %v374
    %v391 = vsub.f32 %v359, %v375
    %v392 = vsub.f32 %v360, %v376
    %v393 = vsub.f32 %v361, %v377
    %v394 = vsub.f32 %v362, %v378
    %v395 = vsub.f32 %v363, %v379
    %v396 = vsub.f32 %v364, %v380
    %v397 = vsub.f32 %v365, %v381
    %v398 = vsub.f32 %v366, %v382
    %v399 = vsub.f32 %v367, %v383
    %v400 = vsub.f32 %v368, %v384
    %v401 = vsub.f32 %v369, %v385
    %v402 = vsub.f32 %v370, %v386
    %v403 = vmax.f32 %v387, 0.0
    %v404 = vmax.f32 %v388, 0.0
    %v405 = vmax.f32 %v389, 0.0
    %v406 = vmax.f32 %v390, 0.0
    %v407 = vmax.f32 %v391, 0.0
    %v408 = vmax.f32 %v392, 0.0
    %v409 = vmax.f32 %v393, 0.0
    %v410 = vmax.f32 %v394, 0.0
    %v411 = vmax.f32 %v395, 0.0
    %v412 = vmax.f32 %v396, 0.0
    %v413 = vmax.f32 %v397, 0.0
    %v414 = vmax.f32 %v398, 0.0
    %v415 = vmax.f32 %v399, 0.0
    %v416 = vmax.f32 %v400, 0.0
    %v417 = vmax.f32 %v401, 0.0
    %v418 = vmax.f32 %v402, 0.0
    %v419 = vsub.f32 1.0, %v403
    %v420 = vsub.f32 1.0, %v404
    %v421 = vsub.f32 1.0, %v405
    %v422 = vsub.f32 1.0, %v406
    %v423 = vsub.f32 1.0, %v407
    %v424 = vsub.f32 1.0, %v408
    %v425 = vsub.f32 1.0, %v409
    %v426 = vsub.f32 1.0, %v410
    %v427 = vsub.f32 1.0, %v411
    %v428 = vsub.f32 1.0, %v412
    %v429 = vsub.f32 1.0, %v413
    %v430 = vsub.f32 1.0, %v414
    %v431 = vsub.f32 1.0, %v415
    %v432 = vsub.f32 1.0, %v416
    %v433 = vsub.f32 1.0, %v417
    %v434 = vsub.f32 1.0, %v418
    %v435 = vmax.f32 %v419, 0.0
    %v436 = vmax.f32 %v420, 0.0
    %v437 = vmax.f32 %v421, 0.0
    %v438 = vmax.f32 %v422, 0.0
    %v439 = vmax.f32 %v423, 0.0
    %v440 = vmax.f32 %v424, 0.0
    %v441 = vmax.f32 %v425, 0.0
    %v442 = vmax.f32 %v426, 0.0
    %v443 = vmax.f32 %v427, 0.0
    %v444 = vmax.f32 %v428, 0.0
    %v445 = vmax.f32 %v429, 0.0
    %v446 = vmax.f32 %v430, 0.0
    %v447 = vmax.f32 %v431, 0.0
    %v448 = vmax.f32 %v432, 0.0
    %v449 = vmax.f32 %v433, 0.0
    %v450 = vmax.f32 %v434, 0.0
    %v451 = vmul.f32 %v74, %v435
    %v452 = vmul.f32 %v75, %v436
    %v453 = vmul.f32 %v76, %v437
    %v454 = vmul.f32 %v77, %v438
    %v455 = vmul.f32 %v78, %v439
    %v456 = vmul.f32 %v79, %v440
    %v457 = vmul.f32 %v80, %v441
    %v458 = vmul.f32 %v81, %v442
    %v459 = vmul.f32 %v82, %v443
    %v460 = vmul.f32 %v83, %v444
    %v461 = vmul.f32 %v84, %v445
    %v462 = vmul.f32 %v85, %v446
    %v463 = vmul.f32 %v86, %v447
    %v464 = vmul.f32 %v87, %v448
    %v465 = vmul.f32 %v88, %v449
    %v466 = vmul.f32 %v89, %v450
    %467 = vst [vmem:[#allocation9] sm:$0xff] %v451
    %468 = vst [vmem:[#allocation9 + $0x8] sm:$0xff] %v452
    %469 = vst [vmem:[#allocation9 + $0x10] sm:$0xff] %v453
    %470 = vst [vmem:[#allocation9 + $0x18] sm:$0xff] %v454
    %471 = vst [vmem:[#allocation9 + $0x20] sm:$0xff] %v455
    %472 = vst [vmem:[#allocation9 + $0x28] sm:$0xff] %v456
    %473 = vst [vmem:[#allocation9 + $0x30] sm:$0xff] %v457
    %474 = vst [vmem:[#allocation9 + $0x38] sm:$0xff] %v458
    %475 = vst [vmem:[#allocation9 + $0x40] sm:$0xff] %v459
    %476 = vst [vmem:[#allocation9 + $0x48] sm:$0xff] %v460
    %477 = vst [vmem:[#allocation9 + $0x50] sm:$0xff] %v461
    %478 = vst [vmem:[#allocation9 + $0x58] sm:$0xff] %v462
    %479 = vst [vmem:[#allocation9 + $0x60] sm:$0xff] %v463
    %480 = vst [vmem:[#allocation9 + $0x68] sm:$0xff] %v464
    %481 = vst [vmem:[#allocation9 + $0x70] sm:$0xff] %v465
    %482 = vst [vmem:[#allocation9 + $0x78] sm:$0xff] %v466
    %v483 = vmul.f32 %v435, %v435
    %v484 = vmul.f32 %v436, %v436
    %v485 = vmul.f32 %v437, %v437
    %v486 = vmul.f32 %v438, %v438
    %v487 = vmul.f32 %v439, %v439
    %v488 = vmul.f32 %v440, %v440
    %v489 = vmul.f32 %v441, %v441
    %v490 = vmul.f32 %v442, %v442
    %v491 = vmul.f32 %v443, %v443
    %v492 = vmul.f32 %v444, %v444
    %v493 = vmul.f32 %v445, %v445
    %v494 = vmul.f32 %v446, %v446
    %v495 = vmul.f32 %v447, %v447
    %v496 = vmul.f32 %v448, %v448
    %v497 = vmul.f32 %v449, %v449
    %v498 = vmul.f32 %v450, %v450
    %v499 = vmul.f32 %v483, 0.006
    %v500 = vmul.f32 %v484, 0.006
    %v501 = vmul.f32 %v485, 0.006
    %v502 = vmul.f32 %v486, 0.006
    %v503 = vmul.f32 %v487, 0.006
    %v504 = vmul.f32 %v488, 0.006
    %v505 = vmul.f32 %v489, 0.006
    %v506 = vmul.f32 %v490, 0.006
    %v507 = vmul.f32 %v491, 0.006
    %v508 = vmul.f32 %v492, 0.006
    %v509 = vmul.f32 %v493, 0.006
    %v510 = vmul.f32 %v494, 0.006
    %v511 = vmul.f32 %v495, 0.006
    %v512 = vmul.f32 %v496, 0.006
    %v513 = vmul.f32 %v497, 0.006
    %v514 = vmul.f32 %v498, 0.006
    %v515 = vmul.f32 %v74, %v74
    %v516 = vmul.f32 %v75, %v75
    %v517 = vmul.f32 %v76, %v76
    %v518 = vmul.f32 %v77, %v77
    %v519 = vmul.f32 %v78, %v78
    %v520 = vmul.f32 %v79, %v79
    %v521 = vmul.f32 %v80, %v80
    %v522 = vmul.f32 %v81, %v81
    %v523 = vmul.f32 %v82, %v82
    %v524 = vmul.f32 %v83, %v83
    %v525 = vmul.f32 %v84, %v84
    %v526 = vmul.f32 %v85, %v85
    %v527 = vmul.f32 %v86, %v86
    %v528 = vmul.f32 %v87, %v87
    %v529 = vmul.f32 %v88, %v88
    %v530 = vmul.f32 %v89, %v89
    %v531 = vmul.f32 %v515, 20.0
    %v532 = vmul.f32 %v516, 20.0
    %v533 = vmul.f32 %v517, 20.0
    %v534 = vmul.f32 %v518, 20.0
    %v535 = vmul.f32 %v519, 20.0
    %v536 = vmul.f32 %v520, 20.0
    %v537 = vmul.f32 %v521, 20.0
    %v538 = vmul.f32 %v522, 20.0
    %v539 = vmul.f32 %v523, 20.0
    %v540 = vmul.f32 %v524, 20.0
    %v541 = vmul.f32 %v525, 20.0
    %v542 = vmul.f32 %v526, 20.0
    %v543 = vmul.f32 %v527, 20.0
    %v544 = vmul.f32 %v528, 20.0
    %v545 = vmul.f32 %v529, 20.0
    %v546 = vmul.f32 %v530, 20.0
    %v547 = vadd.f32 %v499, %v531
    %v548 = vadd.f32 %v500, %v532
    %v549 = vadd.f32 %v501, %v533
    %v550 = vadd.f32 %v502, %v534
    %v551 = vadd.f32 %v503, %v535
    %v552 = vadd.f32 %v504, %v536
    %v553 = vadd.f32 %v505, %v537
    %v554 = vadd.f32 %v506, %v538
    %v555 = vadd.f32 %v507, %v539
    %v556 = vadd.f32 %v508, %v540
    %v557 = vadd.f32 %v509, %v541
    %v558 = vadd.f32 %v510, %v542
    %v559 = vadd.f32 %v511, %v543
    %v560 = vadd.f32 %v512, %v544
    %v561 = vadd.f32 %v513, %v545
    %v562 = vadd.f32 %v514, %v546
    %v563 = vadd.f32 %v547, %v548
    %v564 = vadd.f32 %v563, %v549
    %v565 = vadd.f32 %v564, %v550
    %v566 = vadd.f32 %v565, %v551
    %v567 = vadd.f32 %v566, %v552
    %v568 = vadd.f32 %v567, %v553
    %v569 = vadd.f32 %v568, %v554
    %v570 = vadd.f32 %v569, %v555
    %v571 = vadd.f32 %v570, %v556
    %v572 = vadd.f32 %v571, %v557
    %v573 = vadd.f32 %v572, %v558
    %v574 = vadd.f32 %v573, %v559
    %v575 = vadd.f32 %v574, %v560
    %v576 = vadd.f32 %v575, %v561
    %v577 = vadd.f32 %v576, %v562
    %578 = vadd.xlane.f32.xlu0 %v577
    %v579 = vpop.xlane.xlu0 %578
    %v580 = vrot.slane %v579, 4
    %v581 = vadd.f32 %v579, %v580
    %v582 = vrot.slane %v581, 2
    %v583 = vadd.f32 %v581, %v582
    %v584 = vrot.slane %v583, 1
    %v585 = vadd.f32 %v583, %v584
    %s586 = vtos %v585
    %s587 = smul.f32 %s586, 0.5
    %s588 = scalar_lea.smem [#allocation10], 0
    %589 = sst [smem:[%s588]] %s587
    // Predicated region
    $region26: #{tpu_custom_call.1} parent=1 // pred_check
      _
    $region27: #{tpu_custom_call.1} parent=1 // pred_check_branch
      %591 = sbr.rel (0) target = $region29
    $region28: #{tpu_custom_call.1} parent=1 // pred_region
      %s593 = ssub.s32 2048, 2048
      %594 = vsyncadd [#allocation4], %s593
      %s595 = sshll.u32 [#allocation9], 4
      %s596 = int_to_ptr.vmem [resolvable:$true] %s595
      %601 = dma.vmem_to_hbm [thread:$0]  %s596, 2048, %s3, [#allocation4], 128, 128, 8
    $region29: #{tpu_custom_call.1} parent=1 // pred_fallthru
      _
    // Predicated region
    $region30: #{tpu_custom_call.1} parent=1 // pred_check
      _
    $region31: #{tpu_custom_call.1} parent=1 // pred_check_branch
      %603 = sbr.rel (0) target = $region33
    $region32: #{tpu_custom_call.1} parent=1 // pred_region
      %s605 = ssub.s32 16, 16
      %606 = vsyncadd [#allocation5], %s605
      %609 = dma.smem_to_hbm [#allocation10], 16, %s4, [#allocation5]
    $region33: #{tpu_custom_call.1} parent=1 // pred_fallthru
      _
    // Predicated region
    $region34: #{tpu_custom_call.1} parent=1 // pred_check
      _
    $region35: #{tpu_custom_call.1} parent=1 // pred_check_branch
      %611 = sbr.rel (0) target = $region37
    $region36: #{tpu_custom_call.1} parent=1 // pred_region
      %612 = dma.done [#allocation4], 2048
    $region37: #{tpu_custom_call.1} parent=1 // pred_fallthru
      _
    // Predicated region
    $region38: #{tpu_custom_call.1} parent=1 // pred_check
      _
    $region39: #{tpu_custom_call.1} parent=1 // pred_check_branch
      %614 = sbr.rel (0) target = $region41
    $region40: #{tpu_custom_call.1} parent=1 // pred_region
      %615 = dma.done [#allocation5], 16
    $region41: #{tpu_custom_call.1} parent=1 // pred_fallthru
      _
    %616 = sfence
    %617 = vsyncpa [#allocation3], 1
    %618 = vsyncpa [#allocation7], 1
    %619 = vsyncpa [#allocation4], 1
    %620 = vsyncpa [#allocation5], 1

</llo_original>
